<compile_context>
chip_gen: v7x
topology: tpu7x:2x2x1
jax: 0.10.0
libtpu: 0.0.40
codegen_flags: <defaults>
</compile_context>

<pallas_src>
import jax
import jax.numpy as jnp
from jax.experimental import pallas as pl
from jax.experimental.pallas import tpu as pltpu


def _linear_sigmoid_kernel(xt_ref, w_ref, b_ref, o_ref):
    # xt_ref: (16, TB)  -- batch on lanes
    # w_ref:  (2, 16)   -- PyTorch Linear weight layout (out, in)
    # b_ref:  (2, 1)    -- bias, broadcast along lanes
    # o_ref:  (2, TB)   -- lane-dense output
    y = jnp.dot(w_ref[...], xt_ref[...], preferred_element_type=jnp.float32)
    y = y + b_ref[...]
    o_ref[...] = jax.nn.sigmoid(y).astype(o_ref.dtype)


def net_forward(x, weight, bias, *, tb=512, vmem_limit_bytes=64 * 1024 * 1024):
    """sigmoid(x @ weight.T + bias) via a Pallas TPU kernel.

    x:      (B, 16) float32 (PyTorch Linear input layout)
    weight: (2, 16) float32 (PyTorch Linear weight layout)
    bias:   (2,)    float32
    returns (B, 2)  float32
    """
    B, in_dim = x.shape
    out_dim = weight.shape[0]

    # Layout plumbing in the wrapper: batch -> lanes.
    x_t = x.T                        # (16, B)
    b2d = bias.reshape(out_dim, 1)   # (2, 1)

    if B <= tb:
        # Single-block path: no grid, no pipeline bookkeeping. Block shapes
        # equal the full array dims, so the (8,128) divisibility rule does
        # not apply. Everything lives in VMEM for the one invocation.
        out_t = pl.pallas_call(
            _linear_sigmoid_kernel,
            out_shape=jax.ShapeDtypeStruct((out_dim, B), jnp.float32),
        )(x_t, weight, b2d)
        return out_t.T

    # Tiled path for large B: lane-aligned batch tiles, double-buffered by
    # the Pallas pipeline, batch axis parallel across TensorCores.
    num_tiles = pl.cdiv(B, tb)
    Bp = num_tiles * tb
    if Bp != B:
        x_t = jnp.pad(x_t, ((0, 0), (0, Bp - B)))

    out_t = pl.pallas_call(
        _linear_sigmoid_kernel,
        out_shape=jax.ShapeDtypeStruct((out_dim, Bp), jnp.float32),
        grid=(num_tiles,),
        in_specs=[
            pl.BlockSpec((in_dim, tb), lambda i: (0, i)),        # x tile
            pl.BlockSpec((out_dim, in_dim), lambda i: (0, 0)),   # weight (resident)
            pl.BlockSpec((out_dim, 1), lambda i: (0, 0)),        # bias (resident)
        ],
        out_specs=pl.BlockSpec((out_dim, tb), lambda i: (0, i)),
        compiler_params=pltpu.CompilerParams(
            dimension_semantics=("parallel",),
            vmem_limit_bytes=vmem_limit_bytes,
        ),
    )(x_t, weight, b2d)

    return out_t[:, :B].T


if __name__ == "__main__":
    key = jax.random.PRNGKey(0)
    kx, kw, kb, kx2 = jax.random.split(key, 4)

    IN, OUT = 16, 2

    # Deterministic "parameters" matching nn.Linear(16, 2): weight (2,16), bias (2,)
    bound = 1.0 / jnp.sqrt(IN)
    weight = jax.random.uniform(kw, (OUT, IN), jnp.float32, -bound, bound)
    bias = jax.random.uniform(kb, (OUT,), jnp.float32, -bound, bound)

    # --- small-batch path (no grid) ---
    B_small = 8
    x_small = jax.random.normal(kx, (B_small, IN), jnp.float32)
    out_small = jax.block_until_ready(net_forward(x_small, weight, bias))
    ref_small = jax.nn.sigmoid(x_small @ weight.T + bias)
    assert out_small.shape == (B_small, OUT)
    assert jnp.allclose(out_small, ref_small, atol=1e-5), "small-batch mismatch"

    # --- tiled path (grid over lane-aligned batch tiles) ---
    B_big = 256
    x_big = jax.random.normal(kx2, (B_big, IN), jnp.float32)
    out_big = jax.block_until_ready(net_forward(x_big, weight, bias, tb=128))
    ref_big = jax.nn.sigmoid(x_big @ weight.T + bias)
    assert out_big.shape == (B_big, OUT)
    assert jnp.allclose(out_big, ref_big, atol=1e-5), "tiled-batch mismatch"

    print("KERNEL_OK")
</pallas_src>

<mosaic_0001>
module attributes {stable_mosaic.version = 11 : i64} {
  func.func @_linear_sigmoid_kernel(%arg0: memref<16x8xf32, #tpu.memory_space<vmem>>, %arg1: memref<2x16xf32, #tpu.memory_space<vmem>>, %arg2: memref<2x1xf32, #tpu.memory_space<vmem>>, %arg3: memref<2x8xf32, #tpu.memory_space<vmem>>) attributes {dimension_semantics = [], scalar_prefetch = 0 : i64, scratch_operands = 0 : i64, tpu.core_type = #tpu.core_type<tc>} {
    %c0 = arith.constant 0 : index
    %c0_0 = arith.constant 0 : index
    %0 = vector.load %arg1[%c0, %c0_0] : memref<2x16xf32, #tpu.memory_space<vmem>>, vector<2x16xf32>
    %c0_1 = arith.constant 0 : index
    %c0_2 = arith.constant 0 : index
    %1 = vector.load %arg0[%c0_1, %c0_2] : memref<16x8xf32, #tpu.memory_space<vmem>>, vector<16x8xf32>
    %cst = arith.constant dense<0.000000e+00> : vector<2x8xf32>
    %2 = tpu.matmul %0, %1, %cst {dimension_numbers = #tpu.dot_dimension_numbers<[1], [0], [0], [1], [0, 0, 1, 1], [], []>} : vector<2x16xf32>, vector<16x8xf32>, vector<2x8xf32> -> vector<2x8xf32>
    %c0_3 = arith.constant 0 : index
    %c0_4 = arith.constant 0 : index
    %3 = vector.load %arg2[%c0_3, %c0_4] : memref<2x1xf32, #tpu.memory_space<vmem>>, vector<2x1xf32>
    %4 = vector.broadcast %3 : vector<2x1xf32> to vector<2x8xf32>
    %5 = arith.addf %2, %4 : vector<2x8xf32>
    %6 = arith.negf %5 : vector<2x8xf32>
    %7 = math.exp %6 : vector<2x8xf32>
    %cst_5 = arith.constant 1.000000e+00 : f32
    %8 = vector.broadcast %cst_5 : f32 to vector<2x8xf32>
    %9 = arith.addf %8, %7 : vector<2x8xf32>
    %10 = arith.divf %8, %9 : vector<2x8xf32>
    %c0_6 = arith.constant 0 : index
    %c0_7 = arith.constant 0 : index
    %11 = vector.load %arg3[%c0_6, %c0_7] : memref<2x8xf32, #tpu.memory_space<vmem>>, vector<2x8xf32>
    tpu.vector_store %arg3[%c0_6, %c0_7], %10 {strides = array<i32>} : memref<2x8xf32, #tpu.memory_space<vmem>>, vector<2x8xf32>,
    return
  }
}

</mosaic_0001>

<llo_original>
// kernel: tpu_custom_call.1
$region0: #{tpu_custom_call.1}
  #allocation0 [shape = 'u32[]', space=smem, size = 0x4, offset = 0x4, fixed_abs, tag = 'smem constant byte address 0x4 - core index']
  #allocation1 [shape = 'u32[144,128]{1,0:T(1,128)}', space=vmem, size = 0x12000, scoped, tag = 'internal scratch']
  %s0 = inlined_call_operand.vmem [shape: f32[16,8], index: 0, kind: input, shape index: {}]
  %s1 = inlined_call_operand.vmem [shape: f32[2,16], index: 1, kind: input, shape index: {}]
  %s2 = inlined_call_operand.vmem [shape: f32[2,1], index: 2, kind: input, shape index: {}]
  %s3 = inlined_call_operand.hbm [shape: f32[2,8], index: 3, kind: output, shape index: {}]
  %s4 = sld [smem:[#allocation0]]
  $region22: #{tpu_custom_call.1} parent=0
    _
  %s6 = ssub.s32 1, %s4
  %s7 = scalar_select 0, %s6, %s4
  $region1: #{tpu_custom_call.1} parent=0
    #allocation2 [shape = 'u8[1024]{0}', space=vmem, size = 0x400, scoped, tag = 'output window, operand 0, single buffered']
    #allocation3 [shape = 's32[1]{0}', space=sflag, size = 0x4, scoped, tag = 'scoped memory for tpu_custom_call.1']
    %8 = vsyncpa [#allocation3], 0
    // Predicated region
    $region2: #{tpu_custom_call.1} parent=1 // pred_check
      _
    $region3: #{tpu_custom_call.1} parent=1 // pred_check_branch
      %10 = sbr.rel (0) target = $region5
    $region4: #{tpu_custom_call.1} parent=1 // pred_region
      _
    $region5: #{tpu_custom_call.1} parent=1 // pred_fallthru
      _
    // Predicated region
    $region6: #{tpu_custom_call.1} parent=1 // pred_check
      _
    $region7: #{tpu_custom_call.1} parent=1 // pred_check_branch
      %12 = sbr.rel (0) target = $region9
    $region8: #{tpu_custom_call.1} parent=1 // pred_region
      _
    $region9: #{tpu_custom_call.1} parent=1 // pred_fallthru
      _
    // Predicated region
    $region10: #{tpu_custom_call.1} parent=1 // pred_check
      _
    $region11: #{tpu_custom_call.1} parent=1 // pred_check_branch
      %14 = sbr.rel (0) target = $region13
    $region12: #{tpu_custom_call.1} parent=1 // pred_region
      _
    $region13: #{tpu_custom_call.1} parent=1 // pred_fallthru
      _
    %v15 = vld [vmem:[%s1] sm:$0x3]
    %v16 = vld [vmem:[%s0] sm:$0xff]
    %v17 = vld [vmem:[%s0 + $0x8] sm:$0xff]
    %v18 = vld [vmem:[%s2] sm:$0x3]
    %20 = vset.pattern.permute.xlu0 0
    %21 = vperm.xlu0 %20, %v18
    %v22 = vpop.permute.xlu0 %21
    %vm24 = vcmask 130048
    %v26 = vsel %vm24, %v15, 0
    %28 = vmatprep.subr.mxu0 0.0
    %29 = vmatpush1.msra.mxu0 %v16
    %30 = vmatprep.subr.mxu0 0.0
    %31 = vmatpush1.msra.mxu0 %v17
    %32 = vmatprep.subr.mxu0 0.0
    %33 = vmatpush1.msra.mxu0 0.0
    %34 = vmatprep.subr.mxu0 0.0
    %35 = vmatpush1.msra.mxu0 0.0
    %36 = vmatprep.subr.mxu0 0.0
    %37 = vmatpush1.msra.mxu0 0.0
    %38 = vmatprep.subr.mxu0 0.0
    %39 = vmatpush1.msra.mxu0 0.0
    %40 = vmatprep.subr.mxu0 0.0
    %41 = vmatpush1.msra.mxu0 0.0
    %42 = vmatprep.subr.mxu0 0.0
    %43 = vmatpush1.msra.mxu0 0.0
    %44 = vmatprep.subr.mxu0 0.0
    %45 = vmatpush1.msra.mxu0 0.0
    %46 = vmatprep.subr.mxu0 0.0
    %47 = vmatpush1.msra.mxu0 0.0
    %48 = vmatprep.subr.mxu0 0.0
    %49 = vmatpush1.msra.mxu0 0.0
    %50 = vmatprep.subr.mxu0 0.0
    %51 = vmatpush1.msra.mxu0 0.0
    %52 = vmatprep.subr.mxu0 0.0
    %53 = vmatpush1.msra.mxu0 0.0
    %54 = vmatprep.subr.mxu0 0.0
    %55 = vmatpush1.msra.mxu0 0.0
    %56 = vmatprep.subr.mxu0 0.0
    %57 = vmatpush1.msra.mxu0 0.0
    %58 = vmatprep.subr.mxu0 0.0
    %59 = vmatpush1.msra.mxu0 0.0
    %60 = vmatprep.subr.mxu0 0.0
    %61 = vmatpush1.msra.mxu0 0.0
    %62 = vmatprep.subr.mxu0 0.0
    %63 = vmatpush1.msra.mxu0 0.0
    %64 = vmatprep.subr.mxu0 0.0
    %65 = vmatpush1.msra.mxu0 0.0
    %66 = vmatprep.subr.mxu0 0.0
    %67 = vmatpush1.msra.mxu0 0.0
    %68 = vmatprep.subr.mxu0 0.0
    %69 = vmatpush1.msra.mxu0 0.0
    %70 = vmatprep.subr.mxu0 0.0
    %71 = vmatpush1.msra.mxu0 0.0
    %72 = vmatprep.subr.mxu0 0.0
    %73 = vmatpush1.msra.mxu0 0.0
    %74 = vmatprep.subr.mxu0 0.0
    %75 = vmatpush1.msra.mxu0 0.0
    %76 = vmatprep.subr.mxu0 0.0
    %77 = vmatpush1.msra.mxu0 0.0
    %78 = vmatprep.subr.mxu0 0.0
    %79 = vmatpush1.msra.mxu0 0.0
    %80 = vmatprep.subr.mxu0 0.0
    %81 = vmatpush1.msra.mxu0 0.0
    %82 = vmatprep.subr.mxu0 0.0
    %83 = vmatpush1.msra.mxu0 0.0
    %84 = vmatprep.subr.mxu0 0.0
    %85 = vmatpush1.msra.mxu0 0.0
    %86 = vmatprep.subr.mxu0 0.0
    %87 = vmatpush1.msra.mxu0 0.0
    %88 = vmatprep.subr.mxu0 0.0
    %89 = vmatpush1.msra.mxu0 0.0
    %90 = vmatprep.subr.mxu0 0.0
    %91 = vmatpush1.msra.mxu0 0.0
    %92 = vmatprep.mubr.f32.mxu0 0.0
    %93 = vmatmul.mubr.f32.gmra.mrb[0].mxu0 %v26
    %v94 = vpop.f32.mrb[0].mxu0
    %v95 = vadd.f32 %v22, %v94
    %v96 = vpop.f32.mrb[0].mxu0
    %97 = vdwg.mxu0
    %v98 = vxor.u32 %v95, 2147483648
    %v99 = vmul.f32 %v98, 1.442695
    %v100 = vpow.pop %v99
    %v101 = vadd.f32 %v100, 1.0
    %v102 = vrcp.pop %v101
    %v103 = vmul.f32 1.0, %v102
    %vm104 = vcmask 58368
    %105 = vst.msk [vmem:[#allocation2] sm:$0x3] %vm104, %v103
    // Predicated region
    $region14: #{tpu_custom_call.1} parent=1 // pred_check
      _
    $region15: #{tpu_custom_call.1} parent=1 // pred_check_branch
      %107 = sbr.rel (0) target = $region17
    $region16: #{tpu_custom_call.1} parent=1 // pred_region
      %s109 = ssub.s32 32, 32
      %110 = vsyncadd [#allocation3], %s109
      %s112 = sshll.u32 [#allocation2], 4
      %s113 = int_to_ptr.vmem [resolvable:$true] %s112
      %115 = dma.vmem_to_hbm [thread:$0]  %s113, 32, %s3, [#allocation3]
    $region17: #{tpu_custom_call.1} parent=1 // pred_fallthru
      _
    // Predicated region
    $region18: #{tpu_custom_call.1} parent=1 // pred_check
      _
    $region19: #{tpu_custom_call.1} parent=1 // pred_check_branch
      %117 = sbr.rel (0) target = $region21
    $region20: #{tpu_custom_call.1} parent=1 // pred_region
      %118 = dma.done [#allocation3], 32
    $region21: #{tpu_custom_call.1} parent=1 // pred_fallthru
      _
    %119 = vsyncpa [#allocation3], 1

</llo_original>
